<compile_context>
chip_gen: v6e
topology: v6e:2x2x1
jax: 0.10.0
libtpu: 0.0.40
codegen_flags: <defaults>
</compile_context>

<pallas_src>
from functools import partial

import jax
import jax.numpy as jnp
from jax.experimental import pallas as pl
from jax.experimental.pallas import tpu as pltpu


def _pair(t):
    return tuple(t) if isinstance(t, (tuple, list)) else (t, t)


def _round_up(x, m):
    return ((x + m - 1) // m) * m


def patch_embed_kernel(p_ref, w_ref, b_ref, o_ref):
    # p_ref: (TM, patch_dim)      bf16 row tile of flattened patches
    # w_ref: (patch_dim, dim_pad) bf16 full weight, VMEM-resident across steps
    # b_ref: (1, dim_pad)         f32 bias (resident)
    # o_ref: (TM, dim_pad)        output tile
    acc = jnp.dot(p_ref[...], w_ref[...], preferred_element_type=jnp.float32)
    o_ref[...] = (acc + b_ref[...]).astype(o_ref.dtype)


@partial(jax.jit, static_argnames=("patch_size", "dim", "out_dtype"))
def to_patch_embedding(img, weight_pt_pad, bias_pad, *, patch_size, dim,
                       out_dtype):
    """img: (B, C, H, W) NCHW f32.  Returns (B, num_patches, dim) out_dtype."""
    B, C, H, W = img.shape
    p1, p2 = patch_size
    h, w = H // p1, W // p2
    num_patches = h * w
    patch_dim = C * p1 * p2
    dim_pad = weight_pt_pad.shape[1]

    # Rearrange 'b c (h p1) (w p2) -> b (h w) (p1 p2 c)' — layout glue only;
    # XLA fuses the transpose with the bf16 convert (no extra pad round trip).
    x = img.reshape(B, C, h, p1, w, p2)
    x = jnp.transpose(x, (0, 2, 4, 3, 5, 1))              # (B, h, w, p1, p2, C)
    M = B * num_patches
    patches = x.reshape(M, patch_dim).astype(jnp.bfloat16)

    # --- row tile selection ---------------------------------------------------
    # Large tiles once the weight is resident (amortize ~0.35 us/step); at
    # least 2 grid steps once M >= 256 so v7x's two TensorCores both work.
    if M >= 8192:
        TM = 1024
    elif M >= 2048:
        TM = 512
    elif M >= 512:
        TM = 256
    elif M >= 256:
        TM = 128
    else:
        TM = _round_up(M, 16)          # bf16 sublane packing -> multiple of 16

    M_rows = M
    if M < TM:                          # tiny-input case only (<16 pad rows)
        M_rows = TM
        patches = jnp.pad(patches, ((0, TM - M), (0, 0)))
    # For M >= 256 there is no row padding: the ragged last block is handled
    # by BlockSpec boundary masking; padded garbage rows never reach HBM.

    grid = (pl.cdiv(M_rows, TM),)

    out_itemsize = jnp.dtype(out_dtype).itemsize
    cost = pl.CostEstimate(
        flops=2 * M * patch_dim * dim_pad,
        transcendentals=0,
        bytes_accessed=(M * patch_dim * 2            # bf16 patch reads
                        + patch_dim * dim_pad * 2    # bf16 weight (once)
                        + dim_pad * 4                # bias
                        + M * dim_pad * out_itemsize),
    )

    out = pl.pallas_call(
        patch_embed_kernel,
        out_shape=jax.ShapeDtypeStruct((M_rows, dim_pad), out_dtype),
        grid=grid,
        in_specs=[
            # Patch row tile: streams along the single grid axis.
            pl.BlockSpec((TM, patch_dim), lambda i: (i, 0)),
            # Full weight / bias: constant block index -> single DMA, stays
            # VMEM-resident for every row step.
            pl.BlockSpec((patch_dim, dim_pad), lambda i: (0, 0)),
            pl.BlockSpec((1, dim_pad), lambda i: (0, 0)),
        ],
        out_specs=pl.BlockSpec((TM, dim_pad), lambda i: (i, 0)),
        compiler_params=pltpu.CompilerParams(
            dimension_semantics=("parallel",),      # megacore shards row tiles
            # Footprint: resident weight (~<2 MiB bf16) + double-buffered
            # (TM, patch_dim) bf16 + (TM, dim_pad) out tiles ~= 10-13 MiB for
            # ViT-B/L sized configs; 48 MiB leaves headroom yet stays under
            # v7x's 64 MiB physical VMEM per TensorCore.
            vmem_limit_bytes=48 * 1024 * 1024,
        ),
        cost_estimate=cost,
    )(patches, weight_pt_pad, bias_pad)

    return out[:M, :dim].reshape(B, num_patches, dim)


class ViTPallas:
    """Mirror of the (partial) PyTorch ViT: patch embedding only."""

    def __init__(self, *, image_size, patch_size, dim, pool='cls', channels=3,
                 out_dtype=jnp.float32, key=None):
        image_height, image_width = _pair(image_size)
        patch_height, patch_width = _pair(patch_size)
        assert image_height % patch_height == 0 and image_width % patch_width == 0, \
            'Image dimensions must be divisible by the patch size.'
        assert pool in {'cls', 'mean'}
        self.patch_size = (patch_height, patch_width)
        self.num_patches = (image_height // patch_height) * (image_width // patch_width)
        self.patch_dim = channels * patch_height * patch_width
        self.dim = dim
        self.out_dtype = out_dtype

        # dim padded so the resident weight / output slab is lane-dense;
        # 256-granular (v6e/v7x MXU width) once dim exceeds one lane group.
        self.dim_pad = _round_up(dim, 256) if dim > 128 else 128

        if key is None:
            key = jax.random.PRNGKey(0)
        kw, kb = jax.random.split(key)
        # nn.Linear-equivalent init; weight generated as (dim, patch_dim).
        bound = 1.0 / (self.patch_dim ** 0.5)
        w = jax.random.uniform(kw, (dim, self.patch_dim), jnp.float32,
                               -bound, bound)
        b = jax.random.uniform(kb, (dim,), jnp.float32, -bound, bound)
        self.weight = w                    # f32 nn.Linear layout (reference)
        self.bias = b
        # Hoisted per-forward work: pre-transpose, pad to dim_pad, bf16 cast.
        # NOTE: bf16 matmul inputs are an intentional precision choice
        # (~1e-3 rel. error vs an fp32 nn.Linear); accumulate stays f32.
        self.weight_pt_pad = jnp.pad(
            w.T, ((0, 0), (0, self.dim_pad - dim))).astype(jnp.bfloat16)
        self.bias_pad = jnp.pad(
            b.reshape(1, dim).astype(jnp.float32),
            ((0, 0), (0, self.dim_pad - dim)))

    def __call__(self, img):
        return to_patch_embedding(img, self.weight_pt_pad, self.bias_pad,
                                  patch_size=self.patch_size, dim=self.dim,
                                  out_dtype=self.out_dtype)


if __name__ == "__main__":
    key = jax.random.PRNGKey(0)
    k_img, k_param = jax.random.split(key)

    # Small shapes: batch=2, channels=3, image 16x16, patch 4x4, dim=32
    B, C, H, W = 2, 3, 16, 16
    img = jax.random.normal(k_img, (B, C, H, W), dtype=jnp.float32)

    model = ViTPallas(image_size=16, patch_size=4, dim=32, pool='cls',
                      channels=C, key=k_param)

    out = jax.block_until_ready(model(img))
    assert out.shape == (B, model.num_patches, model.dim)

    # Reference in plain JAX (inputs rounded to bf16 to mirror the kernel's
    # bf16-input / f32-accumulate matmul).
    p1, p2 = model.patch_size
    h, w = H // p1, W // p2
    xr = img.reshape(B, C, h, p1, w, p2)
    xr = jnp.transpose(xr, (0, 2, 4, 3, 5, 1)).reshape(B, h * w, model.patch_dim)
    xr_bf = xr.astype(jnp.bfloat16).astype(jnp.float32)
    wt_bf = model.weight_pt_pad[:, :model.dim].astype(jnp.float32)
    ref = xr_bf @ wt_bf + model.bias

    assert jnp.allclose(out.astype(jnp.float32), ref, atol=2e-3, rtol=2e-3), \
        f"max abs diff {jnp.max(jnp.abs(out.astype(jnp.float32) - ref))}"

    print("KERNEL_OK")
</pallas_src>

<mosaic_0001>
module attributes {stable_mosaic.version = 11 : i64} {
  func.func @patch_embed_kernel(%arg0: i32, %arg1: memref<32x48xbf16, #tpu.memory_space<vmem>>, %arg2: memref<48x128xbf16, #tpu.memory_space<vmem>>, %arg3: memref<1x128xf32, #tpu.memory_space<vmem>>, %arg4: memref<32x128xf32, #tpu.memory_space<vmem>>) attributes {dimension_semantics = [#tpu.dimension_semantics<parallel>], iteration_bounds = array<i64: 1>, scalar_prefetch = 0 : i64, scratch_operands = 0 : i64, tpu.core_type = #tpu.core_type<tc>, window_params = [{transform_indices = @transform_0, window_bounds = array<i64: 32, 48>}, {pipeline_mode = #tpu.pipeline_mode<synchronous>, transform_indices = @transform_1, window_bounds = array<i64: 48, 128>}, {pipeline_mode = #tpu.pipeline_mode<synchronous>, transform_indices = @transform_2, window_bounds = array<i64: 1, 128>}, {transform_indices = @transform_3, window_bounds = array<i64: 32, 128>}]} {
    %c0 = arith.constant 0 : index
    %c0_0 = arith.constant 0 : index
    %0 = vector.load %arg1[%c0, %c0_0] : memref<32x48xbf16, #tpu.memory_space<vmem>>, vector<32x48xbf16>
    %c0_1 = arith.constant 0 : index
    %c0_2 = arith.constant 0 : index
    %1 = vector.load %arg2[%c0_1, %c0_2] : memref<48x128xbf16, #tpu.memory_space<vmem>>, vector<48x128xbf16>
    %cst = arith.constant dense<0.000000e+00> : vector<32x128xf32>
    %2 = tpu.matmul %0, %1, %cst {dimension_numbers = #tpu.dot_dimension_numbers<[1], [0], [0], [1], [0, 0, 1, 1], [], []>} : vector<32x48xbf16>, vector<48x128xbf16>, vector<32x128xf32> -> vector<32x128xf32>
    %c0_3 = arith.constant 0 : index
    %c0_4 = arith.constant 0 : index
    %3 = vector.load %arg3[%c0_3, %c0_4] : memref<1x128xf32, #tpu.memory_space<vmem>>, vector<1x128xf32>
    %4 = vector.broadcast %3 : vector<1x128xf32> to vector<32x128xf32>
    %5 = arith.addf %2, %4 : vector<32x128xf32>
    %c0_5 = arith.constant 0 : index
    %c0_6 = arith.constant 0 : index
    %6 = vector.load %arg4[%c0_5, %c0_6] : memref<32x128xf32, #tpu.memory_space<vmem>>, vector<32x128xf32>
    tpu.vector_store %arg4[%c0_5, %c0_6], %5 {strides = array<i32>} : memref<32x128xf32, #tpu.memory_space<vmem>>, vector<32x128xf32>,
    return
  }
  func.func @transform_0(%arg0: i32) -> (i32, i32) {
    %c0_i32 = arith.constant 0 : i32
    %c0_i32_0 = arith.constant 0 : i32
    return %arg0, %c0_i32 : i32, i32
  }
  func.func @transform_1(%arg0: i32) -> (i32, i32) {
    %c0_i32 = arith.constant 0 : i32
    %c0_i32_0 = arith.constant 0 : i32
    %c0_i32_1 = arith.constant 0 : i32
    return %c0_i32, %c0_i32_0 : i32, i32
  }
  func.func @transform_2(%arg0: i32) -> (i32, i32) {
    %c0_i32 = arith.constant 0 : i32
    %c0_i32_0 = arith.constant 0 : i32
    %c0_i32_1 = arith.constant 0 : i32
    return %c0_i32, %c0_i32_0 : i32, i32
  }
  func.func @transform_3(%arg0: i32) -> (i32, i32) {
    %c0_i32 = arith.constant 0 : i32
    %c0_i32_0 = arith.constant 0 : i32
    return %arg0, %c0_i32 : i32, i32
  }
}

</mosaic_0001>

<llo_original>
// kernel: to_patch_embedding.1
$region0: #{to_patch_embedding.1}
  #allocation0 [shape = 'u32[]', space=smem, size = 0x4, offset = 0x4, fixed_abs, tag = 'smem constant byte address 0x4 - core index']
  #allocation1 [shape = 'u32[144,128]{1,0:T(1,128)}', space=vmem, size = 0x12000, scoped, tag = 'internal scratch']
  %s0 = inlined_call_operand.vmem [shape: bf16[32,48], index: 0, kind: input, shape index: {}]
  %s1 = inlined_call_operand.vmem [shape: bf16[48,128], index: 1, kind: input, shape index: {}]
  %s2 = inlined_call_operand.vmem [shape: f32[1,128], index: 2, kind: input, shape index: {}]
  %s3 = inlined_call_operand.hbm [shape: f32[32,128], index: 3, kind: output, shape index: {}]
  %s4 = sld [smem:[#allocation0]]
  $region22: #{to_patch_embedding.1} parent=0
    _
  %s6 = ssub.s32 1, %s4
  %s7 = scalar_select 0, %s6, %s4
  $region1: #{to_patch_embedding.1} parent=0
    #allocation2 [shape = 'u8[16384]{0}', space=vmem, size = 0x4000, scoped, tag = 'output window, operand 0, single buffered']
    #allocation3 [shape = 's32[1]{0}', space=sflag, size = 0x4, scoped, tag = 'scoped memory for to_patch_embedding.1']
    %8 = vsyncpa [#allocation3], 0
    // Predicated region
    $region2: #{to_patch_embedding.1} parent=1 // pred_check
      _
    $region3: #{to_patch_embedding.1} parent=1 // pred_check_branch
      %10 = sbr.rel (0) target = $region5
    $region4: #{to_patch_embedding.1} parent=1 // pred_region
      _
    $region5: #{to_patch_embedding.1} parent=1 // pred_fallthru
      _
    // Predicated region
    $region6: #{to_patch_embedding.1} parent=1 // pred_check
      _
    $region7: #{to_patch_embedding.1} parent=1 // pred_check_branch
      %12 = sbr.rel (0) target = $region9
    $region8: #{to_patch_embedding.1} parent=1 // pred_region
      _
    $region9: #{to_patch_embedding.1} parent=1 // pred_fallthru
      _
    // Predicated region
    $region10: #{to_patch_embedding.1} parent=1 // pred_check
      _
    $region11: #{to_patch_embedding.1} parent=1 // pred_check_branch
      %14 = sbr.rel (0) target = $region13
    $region12: #{to_patch_embedding.1} parent=1 // pred_region
      _
    $region13: #{to_patch_embedding.1} parent=1 // pred_fallthru
      _
    %v16 = vld [vmem:[%s0] sm:$0xf]
    %v17 = vld [vmem:[%s0 + $0x4] sm:$0xf]
    %v18 = vld [vmem:[%s0 + $0x8] sm:$0xf]
    %v19 = vld [vmem:[%s0 + $0xc] sm:$0xf]
    %v20 = vld [vmem:[%s1] sm:$0xf]
    %v21 = vld [vmem:[%s1 + $0x4] sm:$0xf]
    %v22 = vld [vmem:[%s1 + $0x8] sm:$0xf]
    %v23 = vld [vmem:[%s1 + $0xc] sm:$0xf]
    %v24 = vld [vmem:[%s1 + $0x10] sm:$0xf]
    %v25 = vld [vmem:[%s1 + $0x14] sm:$0xf]
    %v26 = vld [vmem:[%s2] sm:$0x1]
    %v28 = vlaneseq
    %v29 = vshrl.u32 %v28, 7
    %v30 = vsub.s32 0, %v29
    %v31 = vrot.slane %v26, %v30
    %v37 = vunpack.c.l.b16 %v16
    %v38 = vunpack.c.l.b16 %v17
    %v39 = vunpack.c.l.b16 %v18
    %v40 = vunpack.c.l.b16 %v19
    %v41 = vpack.c.b16 %v38, %v37
    %v42 = vpack.c.b16 %v40, %v39
    %v49 = vunpack.c.l.b16 %v20
    %v50 = vunpack.c.l.b16 %v21
    %v51 = vunpack.c.l.b16 %v22
    %v52 = vunpack.c.l.b16 %v23
    %v53 = vunpack.c.l.b16 %v24
    %v54 = vunpack.c.l.b16 %v25
    %v55 = vpack.c.b16 %v50, %v49
    %v56 = vpack.c.b16 %v52, %v51
    %v57 = vpack.c.b16 %v54, %v53
    %vm61 = vcmask 392192
    %v63 = vsel %vm61, %v41, 0
    %v66 = vsel %vm61, %v42, 0
    %68 = vmatprep.subr.bf16.mxu0 0
    %69 = vmatpush1.bf16.msra.mxu0 0
    %70 = vmatprep.subr.bf16.mxu0 0
    %71 = vmatpush1.bf16.msra.mxu0 0
    %72 = vmatprep.subr.bf16.mxu0 0
    %73 = vmatpush1.bf16.msra.mxu0 0
    %74 = vmatprep.subr.bf16.mxu0 0
    %75 = vmatpush1.bf16.msra.mxu0 0
    %76 = vmatprep.subr.bf16.mxu0 0
    %77 = vmatpush1.bf16.msra.mxu0 0
    %78 = vmatprep.subr.bf16.mxu0 0
    %79 = vmatpush1.bf16.msra.mxu0 %v57
    %80 = vmatprep.subr.bf16.mxu0 0
    %81 = vmatpush1.bf16.msra.mxu0 %v56
    %82 = vmatprep.subr.bf16.mxu0 0
    %83 = vmatpush1.bf16.msra.mxu0 %v55
    %84 = vmatprep.subr.bf16.mxu0 0
    %85 = vmatpush2.bf16.msra.mxu0 0
    %86 = vmatprep.subr.bf16.mxu0 0
    %87 = vmatpush2.bf16.msra.mxu0 0
    %88 = vmatprep.subr.bf16.mxu0 0
    %89 = vmatpush2.bf16.msra.mxu0 0
    %90 = vmatprep.subr.bf16.mxu0 0
    %91 = vmatpush2.bf16.msra.mxu0 0
    %92 = vmatprep.subr.bf16.mxu0 0
    %93 = vmatpush2.bf16.msra.mxu0 0
    %94 = vmatprep.subr.bf16.mxu0 0
    %95 = vmatpush2.bf16.msra.mxu0 0
    %96 = vmatprep.subr.bf16.mxu0 0
    %97 = vmatpush2.bf16.msra.mxu0 0
    %98 = vmatprep.subr.bf16.mxu0 0
    %99 = vmatpush2.bf16.msra.mxu0 0
    %100 = vmatprep.mubr.bf16.mxu0 0
    %101 = vmatmul.mubr.bf16.gmra.mxu0 %v63
    %v102 = vpop.f32.mrf.mxu0
    %v103 = vadd.f32 %v31, %v102
    %v104 = vpop.f32.mrf.mxu0
    %v105 = vpop.f32.mrf.mxu0
    %v106 = vadd.f32 %v31, %v105
    %v107 = vpop.f32.mrf.mxu0
    %108 = vmatprep.mubr.bf16.mxu0 0
    %109 = vmatmul.mubr.bf16.gmra.mxu0 %v66
    %v110 = vpop.f32.mrf.mxu0
    %v111 = vadd.f32 %v31, %v110
    %v112 = vpop.f32.mrf.mxu0
    %v113 = vpop.f32.mrf.mxu0
    %v114 = vadd.f32 %v31, %v113
    %v115 = vpop.f32.mrf.mxu0
    %116 = vdwg.mxu0
    %117 = vst [vmem:[#allocation2] sm:$0xff] %v103
    %118 = vst [vmem:[#allocation2 + $0x8] sm:$0xff] %v106
    %119 = vst [vmem:[#allocation2 + $0x10] sm:$0xff] %v111
    %120 = vst [vmem:[#allocation2 + $0x18] sm:$0xff] %v114
    // Predicated region
    $region14: #{to_patch_embedding.1} parent=1 // pred_check
      _
    $region15: #{to_patch_embedding.1} parent=1 // pred_check_branch
      %122 = sbr.rel (0) target = $region17
    $region16: #{to_patch_embedding.1} parent=1 // pred_region
      %s124 = ssub.s32 512, 512
      %125 = vsyncadd [#allocation3], %s124
      %s126 = sshll.u32 [#allocation2], 4
      %s127 = int_to_ptr.vmem [resolvable:$true] %s126
      %132 = dma.vmem_to_hbm [thread:$0]  %s127, 512, %s3, [#allocation3], 128, 128, 8
    $region17: #{to_patch_embedding.1} parent=1 // pred_fallthru
      _
    // Predicated region
    $region18: #{to_patch_embedding.1} parent=1 // pred_check
      _
    $region19: #{to_patch_embedding.1} parent=1 // pred_check_branch
      %134 = sbr.rel (0) target = $region21
    $region20: #{to_patch_embedding.1} parent=1 // pred_region
      %135 = dma.done [#allocation3], 512
    $region21: #{to_patch_embedding.1} parent=1 // pred_fallthru
      _
    %136 = vsyncpa [#allocation3], 1

</llo_original>
